<compile_context>
chip_gen: v7x
topology: tpu7x:2x2x1
jax: 0.10.0
libtpu: 0.0.40
codegen_flags: <defaults>
</compile_context>

<pallas_src>
import functools

import jax
import jax.numpy as jnp
from jax.experimental import pallas as pl
from jax.experimental.pallas import tpu as pltpu

# Lane-dense layout: 1152 = lcm(9, 128) -> one row holds exactly 128 frames'
# worth of row-major K entries, so (rows, 1152) is contiguous in HBM and
# lane-dense in VMEM with no padding waste.
_LANE_WIDTH = 9 * 128  # 1152

# Rows per block on the lane-dense tiled path (huge N only):
# 1024 x 1152 f32 ~= 4.6 MiB / buffer, ~18.4 MiB with in+out double buffering.
_DENSE_TILE_ROWS = 1024

# Frames per block on the fallback (N, 9) path (N not a multiple of 128):
# the 9-wide lane axis pads to 128 in VMEM -> 4096 x 128 f32 = 2 MiB / buffer.
_FALLBACK_TILE_N = 4096

# Below this many frames, skip Pallas entirely (dispatch + glue dominate).
_PALLAS_MIN_N = 32

_VMEM_LIMIT_BYTES = 32 * 1024 * 1024


def _normalize_ks_kernel(ks_ref, out_ref, *, h, w):
    """Elementwise FMA over row-major-flattened 3x3 intrinsics.

    Works for both layouts used below — (rows, 1152) and (N, 9) — because in
    both cases every block's column 0 sits at a global flat offset that is a
    multiple of 9, so `column % 9` is the K-entry index for every element.
    Scale/offset are rebuilt from an iota + scalar literals, so the kernel
    captures no array constants (v2 compile error) and needs no extra inputs.
    """
    e = jax.lax.broadcasted_iota(jnp.int32, ks_ref.shape, dimension=1) % 9
    two_over_w = jnp.float32(2.0 / w)
    two_over_h = jnp.float32(2.0 / h)
    scale = jnp.where(
        (e == 0) | (e == 2), two_over_w,
        jnp.where((e == 4) | (e == 5), two_over_h, jnp.float32(1.0)))
    offset = jnp.where((e == 2) | (e == 5), jnp.float32(-1.0), jnp.float32(0.0))
    x = ks_ref[...].astype(jnp.float32)          # up-cast on-vreg
    out_ref[...] = (x * scale + offset).astype(out_ref.dtype)  # down-cast on-vreg


def _run_normalize_2d(x2d, tile_rows, h, w):
    """Run the kernel over a 2-D view, tiling the (sublane) row axis only."""
    rows, cols = x2d.shape
    tile_rows = min(tile_rows, rows)
    kernel = functools.partial(_normalize_ks_kernel, h=h, w=w)
    return pl.pallas_call(
        kernel,
        out_shape=jax.ShapeDtypeStruct((rows, cols), x2d.dtype),
        grid=(pl.cdiv(rows, tile_rows),),
        in_specs=[pl.BlockSpec((tile_rows, cols), lambda i: (i, 0))],
        out_specs=pl.BlockSpec((tile_rows, cols), lambda i: (i, 0)),
        compiler_params=pltpu.CompilerParams(
            dimension_semantics=("parallel",),
            vmem_limit_bytes=_VMEM_LIMIT_BYTES,
        ),
    )(x2d)


def _normalize_camera_intrinsics_pallas(
    Ks_flat, h, w, *,
    dense_tile_rows=_DENSE_TILE_ROWS,
    fallback_tile_n=_FALLBACK_TILE_N,
):
    """Ks_flat: (N, 3, 3); h, w: static Python floats -> normalized (N, 3, 3)."""
    N = Ks_flat.shape[0]
    total = 9 * N
    if total % _LANE_WIDTH == 0:
        # Lane-dense path (N % 128 == 0): free contiguous reshape, no
        # transpose/pad, unmasked full-lane stores, ragged tail blocks masked.
        rows = total // _LANE_WIDTH
        x2d = Ks_flat.reshape(rows, _LANE_WIDTH)
        out2d = _run_normalize_2d(x2d, dense_tile_rows, h, w)
    else:
        # Fallback: natural (N, 9) view.  The 9-wide lane axis pads to 128 in
        # VMEM (wasteful, but only hit for non-128-aligned N); still no
        # transpose / pad / slice round-trips anywhere.
        x2d = Ks_flat.reshape(N, 9)
        out2d = _run_normalize_2d(x2d, fallback_tile_n, h, w)
    return out2d.reshape(N, 3, 3)


def _normalize_camera_intrinsics_jnp(Ks, h, w):
    """Pure-JAX version (small-N fast path and test reference)."""
    scale = jnp.asarray(
        [2.0 / w, 1.0, 2.0 / w, 1.0, 2.0 / h, 2.0 / h, 1.0, 1.0, 1.0],
        dtype=jnp.float32).reshape(3, 3)
    offset = jnp.asarray(
        [0.0, 0.0, -1.0, 0.0, 0.0, -1.0, 0.0, 0.0, 0.0],
        dtype=jnp.float32).reshape(3, 3)
    out = Ks.astype(jnp.float32) * scale + offset
    return out.astype(Ks.dtype)


def normalize_camera_intrinsics(Ks_flat, h, w, *, min_pallas_n=_PALLAS_MIN_N,
                                **tile_overrides):
    if Ks_flat.shape[0] < min_pallas_n:
        # A few frames: a single fused XLA FMA beats any custom-call dispatch.
        return _normalize_camera_intrinsics_jnp(Ks_flat, h, w)
    return _normalize_camera_intrinsics_pallas(Ks_flat, h, w, **tile_overrides)


def normalization_processor_forward(img_data, Ks):
    """Mirrors NormalizationProcessor.forward(img_data, Ks) -> (img_data, Ks_norm)."""
    flatten = Ks.ndim == 4
    Ks_shape = Ks.shape
    if flatten:
        assert img_data.ndim == 5
        img_flat = img_data.reshape((-1,) + img_data.shape[2:])
        Ks_flat = Ks.reshape((-1,) + Ks.shape[2:])
    else:
        assert img_data.ndim == 4
        img_flat = img_data
        Ks_flat = Ks

    H, W = img_flat.shape[-2:]
    Ks_norm = normalize_camera_intrinsics(Ks_flat, float(H), float(W))

    if flatten:
        Ks_norm = Ks_norm.reshape(Ks_shape)
    # img_data is returned unchanged (identity pass-through in the reference).
    return img_data, Ks_norm


def _make_Ks(key, batch_shape):
    """Plausible pixel-space intrinsics, with a small skew to exercise the
    'untouched' entries."""
    k_f, k_c, k_s = jax.random.split(key, 3)
    focals = jax.random.uniform(k_f, batch_shape + (2,), minval=10.0, maxval=30.0)
    centers = jax.random.uniform(k_c, batch_shape + (2,), minval=4.0, maxval=12.0)
    skew = jax.random.uniform(k_s, batch_shape, minval=-0.1, maxval=0.1)
    Ks = jnp.zeros(batch_shape + (3, 3), dtype=jnp.float32)
    Ks = Ks.at[..., 0, 0].set(focals[..., 0])
    Ks = Ks.at[..., 1, 1].set(focals[..., 1])
    Ks = Ks.at[..., 0, 2].set(centers[..., 0])
    Ks = Ks.at[..., 1, 2].set(centers[..., 1])
    Ks = Ks.at[..., 0, 1].set(skew)
    Ks = Ks.at[..., 2, 2].set(1.0)
    return Ks


if __name__ == "__main__":
    key = jax.random.PRNGKey(0)
    keys = jax.random.split(key, 8)

    # --- case 1: typical small shapes, flattened (B, F) layout -> jnp fast path.
    B, F, C, H, W = 2, 4, 3, 16, 16
    img1 = jax.random.normal(keys[0], (B, F, C, H, W), dtype=jnp.float32)
    Ks1 = _make_Ks(keys[1], (B, F))
    img1_out, Ks1_out = normalization_processor_forward(img1, Ks1)
    jax.block_until_ready((img1_out, Ks1_out))
    assert img1_out.shape == img1.shape and Ks1_out.shape == Ks1.shape
    assert jnp.allclose(img1_out, img1)
    assert jnp.allclose(Ks1_out,
                        _normalize_camera_intrinsics_jnp(Ks1, float(H), float(W)),
                        atol=1e-5, rtol=1e-5)

    # --- case 2: non-flattened layout, N=48 (not a multiple of 128, > fast-path
    #     threshold) -> Pallas fallback (N, 9) single-block path; H != W.
    N2, H2, W2 = 48, 24, 32
    img2 = jax.random.normal(keys[2], (N2, C, H2, W2), dtype=jnp.float32)
    Ks2 = _make_Ks(keys[3], (N2,))
    img2_out, Ks2_out = normalization_processor_forward(img2, Ks2)
    jax.block_until_ready((img2_out, Ks2_out))
    assert jnp.allclose(img2_out, img2)
    assert jnp.allclose(Ks2_out,
                        _normalize_camera_intrinsics_jnp(Ks2, float(H2), float(W2)),
                        atol=1e-5, rtol=1e-5)

    # --- case 3: flattened, N = 2*128 (multiple of 128) -> lane-dense
    #     (rows, 1152) Pallas path, single block.
    B3, F3, H3, W3 = 2, 128, 16, 24
    img3 = jax.random.normal(keys[4], (B3, F3, C, H3, W3), dtype=jnp.float32)
    Ks3 = _make_Ks(keys[5], (B3, F3))
    img3_out, Ks3_out = normalization_processor_forward(img3, Ks3)
    jax.block_until_ready((img3_out, Ks3_out))
    assert jnp.allclose(img3_out, img3)
    assert jnp.allclose(Ks3_out,
                        _normalize_camera_intrinsics_jnp(Ks3, float(H3), float(W3)),
                        atol=1e-5, rtol=1e-5)

    # --- case 4: lane-dense multi-block grid with a ragged last block
    #     (N = 128*20 frames, 8-row tiles -> grid=3, last block masked).
    N4, H4, W4 = 128 * 20, 20, 30
    Ks4 = _make_Ks(keys[6], (N4,))
    out4 = _normalize_camera_intrinsics_pallas(Ks4, float(H4), float(W4),
                                               dense_tile_rows=8)
    jax.block_until_ready(out4)
    assert jnp.allclose(out4,
                        _normalize_camera_intrinsics_jnp(Ks4, float(H4), float(W4)),
                        atol=1e-5, rtol=1e-5)

    # --- case 5: fallback multi-block grid with a ragged last block
    #     (N = 100 frames, 32-frame tiles -> grid=4, last block masked).
    N5, H5, W5 = 100, 18, 26
    Ks5 = _make_Ks(keys[7], (N5,))
    out5 = _normalize_camera_intrinsics_pallas(Ks5, float(H5), float(W5),
                                               fallback_tile_n=32)
    jax.block_until_ready(out5)
    assert jnp.allclose(out5,
                        _normalize_camera_intrinsics_jnp(Ks5, float(H5), float(W5)),
                        atol=1e-5, rtol=1e-5)

    print("KERNEL_OK")
</pallas_src>

<mosaic_0001>
module attributes {stable_mosaic.version = 11 : i64} {
  func.func @_normalize_ks_kernel(%arg0: i32, %arg1: memref<48x9xf32, #tpu.memory_space<vmem>>, %arg2: memref<48x9xf32, #tpu.memory_space<vmem>>) attributes {dimension_semantics = [#tpu.dimension_semantics<parallel>], iteration_bounds = array<i64: 1>, scalar_prefetch = 0 : i64, scratch_operands = 0 : i64, tpu.core_type = #tpu.core_type<tc>, window_params = [{transform_indices = @transform_0, window_bounds = array<i64: 48, 9>}, {transform_indices = @transform_1, window_bounds = array<i64: 48, 9>}]} {
    %0 = tpu.iota {dimensions = array<i32: 1>} : vector<48x9xi32>
    %c9_i32 = arith.constant 9 : i32
    %c0_i32 = arith.constant 0 : i32
    %1 = arith.cmpi eq, %c9_i32, %c0_i32 : i32
    %c1_i32 = arith.constant 1 : i32
    %2 = arith.select %1, %c1_i32, %c9_i32 : i32
    %3 = vector.broadcast %2 : i32 to vector<48x9xi32>
    %4 = arith.remsi %0, %3 : vector<48x9xi32>
    %c0_i32_0 = arith.constant 0 : i32
    %5 = vector.broadcast %c0_i32_0 : i32 to vector<48x9xi32>
    %6 = arith.cmpi ne, %4, %5 : vector<48x9xi32>
    %c0_i32_1 = arith.constant 0 : i32
    %7 = vector.broadcast %c0_i32_1 : i32 to vector<48x9xi32>
    %8 = arith.cmpi slt, %4, %7 : vector<48x9xi32>
    %c0_i32_2 = arith.constant 0 : i32
    %9 = arith.cmpi slt, %2, %c0_i32_2 : i32
    %10 = vector.broadcast %9 : i1 to vector<48x9xi1>
    %11 = vector.broadcast %10 : vector<48x9xi1> to vector<48x9xi1>
    %12 = arith.xori %8, %11 : vector<48x9xi1>
    %13 = arith.andi %12, %6 : vector<48x9xi1>
    %14 = vector.broadcast %2 : i32 to vector<48x9xi32>
    %15 = arith.addi %4, %14 : vector<48x9xi32>
    %16 = arith.select %13, %15, %4 : vector<48x9xi1>, vector<48x9xi32>
    %c0_i32_3 = arith.constant 0 : i32
    %17 = vector.broadcast %c0_i32_3 : i32 to vector<48x9xi32>
    %18 = arith.cmpi eq, %16, %17 : vector<48x9xi32>
    %c2_i32 = arith.constant 2 : i32
    %19 = vector.broadcast %c2_i32 : i32 to vector<48x9xi32>
    %20 = arith.cmpi eq, %16, %19 : vector<48x9xi32>
    %21 = arith.ori %18, %20 : vector<48x9xi1>
    %c4_i32 = arith.constant 4 : i32
    %22 = vector.broadcast %c4_i32 : i32 to vector<48x9xi32>
    %23 = arith.cmpi eq, %16, %22 : vector<48x9xi32>
    %c5_i32 = arith.constant 5 : i32
    %24 = vector.broadcast %c5_i32 : i32 to vector<48x9xi32>
    %25 = arith.cmpi eq, %16, %24 : vector<48x9xi32>
    %26 = arith.ori %23, %25 : vector<48x9xi1>
    %cst = arith.constant 0.0833333358 : f32
    %cst_4 = arith.constant 1.000000e+00 : f32
    %27 = vector.broadcast %cst : f32 to vector<48x9xf32>
    %28 = vector.broadcast %cst_4 : f32 to vector<48x9xf32>
    %29 = arith.select %26, %27, %28 : vector<48x9xi1>, vector<48x9xf32>
    %cst_5 = arith.constant 6.250000e-02 : f32
    %30 = vector.broadcast %cst_5 : f32 to vector<48x9xf32>
    %31 = arith.select %21, %30, %29 : vector<48x9xi1>, vector<48x9xf32>
    %c2_i32_6 = arith.constant 2 : i32
    %32 = vector.broadcast %c2_i32_6 : i32 to vector<48x9xi32>
    %33 = arith.cmpi eq, %16, %32 : vector<48x9xi32>
    %c5_i32_7 = arith.constant 5 : i32
    %34 = vector.broadcast %c5_i32_7 : i32 to vector<48x9xi32>
    %35 = arith.cmpi eq, %16, %34 : vector<48x9xi32>
    %36 = arith.ori %33, %35 : vector<48x9xi1>
    %cst_8 = arith.constant -1.000000e+00 : f32
    %cst_9 = arith.constant 0.000000e+00 : f32
    %37 = vector.broadcast %cst_8 : f32 to vector<48x9xf32>
    %38 = vector.broadcast %cst_9 : f32 to vector<48x9xf32>
    %39 = arith.select %36, %37, %38 : vector<48x9xi1>, vector<48x9xf32>
    %c0 = arith.constant 0 : index
    %c0_10 = arith.constant 0 : index
    %40 = vector.load %arg1[%c0, %c0_10] : memref<48x9xf32, #tpu.memory_space<vmem>>, vector<48x9xf32>
    %41 = arith.mulf %40, %31 : vector<48x9xf32>
    %42 = arith.addf %41, %39 : vector<48x9xf32>
    %c0_11 = arith.constant 0 : index
    %c0_12 = arith.constant 0 : index
    %43 = vector.load %arg2[%c0_11, %c0_12] : memref<48x9xf32, #tpu.memory_space<vmem>>, vector<48x9xf32>
    tpu.vector_store %arg2[%c0_11, %c0_12], %42 {strides = array<i32>} : memref<48x9xf32, #tpu.memory_space<vmem>>, vector<48x9xf32>,
    return
  }
  func.func @transform_0(%arg0: i32) -> (i32, i32) {
    %c0_i32 = arith.constant 0 : i32
    %c0_i32_0 = arith.constant 0 : i32
    return %arg0, %c0_i32 : i32, i32
  }
  func.func @transform_1(%arg0: i32) -> (i32, i32) {
    %c0_i32 = arith.constant 0 : i32
    %c0_i32_0 = arith.constant 0 : i32
    return %arg0, %c0_i32 : i32, i32
  }
}

</mosaic_0001>

<llo_original>
// kernel: tpu_custom_call.1
$region0: #{tpu_custom_call.1}
  #allocation0 [shape = 'u32[]', space=smem, size = 0x4, offset = 0x4, fixed_abs, tag = 'smem constant byte address 0x4 - core index']
  #allocation1 [shape = 'u32[144,128]{1,0:T(1,128)}', space=vmem, size = 0x12000, scoped, tag = 'internal scratch']
  %s0 = inlined_call_operand.vmem [shape: f32[48,9], index: 0, kind: input, shape index: {}]
  %s1 = inlined_call_operand.vmem [shape: f32[48,9], index: 1, kind: output, shape index: {}]
  %s2 = sld [smem:[#allocation0]]
  $region14: #{tpu_custom_call.1} parent=0
    _
  %s4 = ssub.s32 1, %s2
  %s5 = scalar_select 0, %s4, %s2
  // Predicated region
  $region2: #{tpu_custom_call.1} parent=0 // pred_check
    _
  $region3: #{tpu_custom_call.1} parent=0 // pred_check_branch
    %7 = sbr.rel (0) target = $region5
  $region4: #{tpu_custom_call.1} parent=0 // pred_region
    _
  $region5: #{tpu_custom_call.1} parent=0 // pred_fallthru
    _
  %v8 = vlaneseq
  %v9 = vand.u32 %v8, 127
  %vm10 = vcmp.lt.s32.totalorder %v9, 0
  %v11 = vsub.s32 0, %v9
  %v12 = vsel %vm10, %v11, %v9
  %v13 = vmul.u32.u64.compose %v12, 3817748708
  %v14 = vextract.low.u32 %v13
  %v15 = vextract.high.u32 %v13
  %v16 = vshrl.u32 %v15, 3
  %v17 = vmul.u32 %v16, 9
  %v18 = vsub.s32 %v12, %v17
  %v19 = vsub.s32 0, %v18
  %v20 = vsel %vm10, %v19, %v18
  %vm21 = vcmp.ne.s32.totalorder %v20, 0
  %vm22 = vcmp.lt.s32.totalorder %v20, 0
  %vm23 = vmand %vm22, %vm21
  %v24 = vadd.s32 %v20, 9
  %v25 = vsel %vm23, %v24, %v20
  %vm26 = vcmp.eq.s32.totalorder %v25, 0
  %vm27 = vcmp.eq.s32.totalorder %v25, 2
  %vm28 = vmor %vm26, %vm27
  %vm29 = vcmp.eq.s32.totalorder %v25, 4
  %vm30 = vcmp.eq.s32.totalorder %v25, 5
  %vm31 = vmor %vm29, %vm30
  %v32 = vsel %vm31, 0.083333336, 1.0
  %v33 = vsel %vm28, 0.0625, %v32
  %vm34 = vmor %vm27, %vm30
  %v35 = vsel %vm34, -1.0, 0.0
  %v36 = vld [vmem:[%s0] sm:$0xff]
  %v37 = vld [vmem:[%s0 + $0x8] sm:$0xff]
  %v38 = vld [vmem:[%s0 + $0x10] sm:$0xff]
  %v39 = vld [vmem:[%s0 + $0x18] sm:$0xff]
  %v40 = vld [vmem:[%s0 + $0x20] sm:$0xff]
  %v41 = vld [vmem:[%s0 + $0x28] sm:$0xff]
  %v42 = vmul.f32 %v36, %v33
  %v43 = vmul.f32 %v37, %v33
  %v44 = vmul.f32 %v38, %v33
  %v45 = vmul.f32 %v39, %v33
  %v46 = vmul.f32 %v40, %v33
  %v47 = vmul.f32 %v41, %v33
  %v48 = vadd.f32 %v42, %v35
  %v49 = vadd.f32 %v43, %v35
  %v50 = vadd.f32 %v44, %v35
  %v51 = vadd.f32 %v45, %v35
  %v52 = vadd.f32 %v46, %v35
  %v53 = vadd.f32 %v47, %v35
  %vm54 = vcmask 72704
  %55 = vst.msk [vmem:[%s1] sm:$0xff] %vm54, %v48
  %56 = vst.msk [vmem:[%s1 + $0x8] sm:$0xff] %vm54, %v49
  %57 = vst.msk [vmem:[%s1 + $0x10] sm:$0xff] %vm54, %v50
  %58 = vst.msk [vmem:[%s1 + $0x18] sm:$0xff] %vm54, %v51
  %59 = vst.msk [vmem:[%s1 + $0x20] sm:$0xff] %vm54, %v52
  %60 = vst.msk [vmem:[%s1 + $0x28] sm:$0xff] %vm54, %v53
  // Predicated region
  $region6: #{tpu_custom_call.1} parent=0 // pred_check
    _
  $region7: #{tpu_custom_call.1} parent=0 // pred_check_branch
    %62 = sbr.rel (0) target = $region9
  $region8: #{tpu_custom_call.1} parent=0 // pred_region
    _
  $region9: #{tpu_custom_call.1} parent=0 // pred_fallthru
    _
  // Predicated region
  $region10: #{tpu_custom_call.1} parent=0 // pred_check
    _
  $region11: #{tpu_custom_call.1} parent=0 // pred_check_branch
    %64 = sbr.rel (0) target = $region13
  $region12: #{tpu_custom_call.1} parent=0 // pred_region
    _
  $region13: #{tpu_custom_call.1} parent=0 // pred_fallthru
    _

</llo_original>
